<compile_context>
chip_gen: v6e
topology: v6e:2x2x1
jax: 0.10.0
libtpu: 0.0.40
codegen_flags: <defaults>
</compile_context>

<pallas_src>
import jax
import jax.numpy as jnp
from jax.experimental import pallas as pl
from jax.experimental.pallas import tpu as pltpu


def _round_up(x, m):
    return (x + m - 1) // m * m


def base_conv_layer_forward(x, W, b, *, stride=1, pad=0, flip_filters=True,
                            tile_m=512):
    """Forward pass of BaseConvLayer (Conv2D, valid padding, stride 1).

    x: (N, C, H, Wi) float32 (NCHW),  W: (F, C, KH, KW) float32 (OIHW),
    b: (F,) float32.  Returns (N, F, Ho, Wo) float32.
    """
    assert stride == 1 and pad == 0, "this instantiation covers stride=1, pad=0"
    N, C, H, Wi = x.shape
    F, Cw, KH, KW = W.shape
    assert Cw == C and H >= KH and Wi >= KW
    Ho = H - KH + 1            # conv_output_length(H, KH, 1, 0)
    Wo = Wi - KW + 1           # conv_output_length(Wi, KW, 1, 0)

    # "Wide rows": compute all Wi columns per output row, discard the last
    # KW-1 in the wrapper slice (keeps the flat spatial dim lane-dense).
    M_need = Ho * Wi
    tile_m = max(128, min(_round_up(tile_m, 128), _round_up(M_need, 128)))
    R = pl.cdiv(M_need, tile_m)              # row tiles per image
    Mpad = R * tile_m
    OFF = (KH - 1) * Wi + (KW - 1)           # largest flat shift of any filter tap
    HALO = tile_m + _round_up(OFF, 128)      # 128-aligned in-kernel window length
    Lpad = Mpad + _round_up(OFF, 128)        # padded flat input length

    # ---- wrapper prep: one fused cast+pad pass over x, NO transpose, NO im2col ----
    x_flat = jnp.pad(x.reshape(N, C, H * Wi).astype(jnp.bfloat16),
                     ((0, 0), (0, 0), (0, Lpad - H * Wi)))

    # flip_filters=True -> true convolution == correlation with flipped W.
    Wf = W[:, :, ::-1, ::-1] if flip_filters else W
    # (tap, F, C): per-tap LHS for the transposed matmul out[f, m].
    w_mat = jnp.transpose(Wf, (2, 3, 0, 1)).reshape(KH * KW, F, C).astype(jnp.bfloat16)
    b_mat = b.reshape(F, 1).astype(jnp.float32)

    def kernel(x_ref, w_ref, b_ref, o_ref):
        r = pl.program_id(1)
        base = pl.multiple_of(r * tile_m, 128)
        # One 128-aligned dynamic window load per tile; per-tap shifts become
        # cheap static lane slices of this value.
        xwin = x_ref[0, :, pl.ds(base, HALO)]          # (C, HALO) bf16

        # f32 accumulator of shape (F, tile_m): a few vregs, stays in registers.
        acc = jnp.zeros((F, tile_m), jnp.float32)
        for di in range(KH):                           # static, fully unrolled
            for dj in range(KW):
                t = di * KW + dj
                off = di * Wi + dj                     # static flat shift
                xs = xwin[:, off:off + tile_m]         # (C, tile_m) bf16
                acc = acc + jnp.dot(w_ref[t], xs,      # (F, C) x (C, tile_m)
                                    preferred_element_type=jnp.float32)

        acc = acc + b_ref[...]                         # tied biases, (F, 1) broadcast
        o_ref[0] = jnp.maximum(acc, 0.0).astype(o_ref.dtype)   # rectify, bf16 store

    out_wide = pl.pallas_call(
        kernel,
        out_shape=jax.ShapeDtypeStruct((N, F, Mpad), jnp.bfloat16),
        grid=(N, R),
        in_specs=[
            # whole per-image band resident in VMEM, auto-pipelined across n
            pl.BlockSpec((1, C, Lpad), lambda n, r: (n, 0, 0)),
            pl.BlockSpec((KH * KW, F, C), lambda n, r: (0, 0, 0)),  # weights resident
            pl.BlockSpec((F, 1), lambda n, r: (0, 0)),              # bias resident
        ],
        out_specs=pl.BlockSpec((1, F, tile_m), lambda n, r: (n, 0, r)),
        compiler_params=pltpu.CompilerParams(
            # No carried state across either axis -> both can shard across
            # TensorCores (helps v7x megacore even when N == 1).
            dimension_semantics=("parallel", "parallel"),
            vmem_limit_bytes=32 * 1024 * 1024,
        ),
    )(x_flat, w_mat, b_mat)

    # (N, F, Mpad) -> (N, F, Ho, Wo): already NCHW; single fused slice/reshape/cast.
    out = out_wide[:, :, :Ho * Wi].reshape(N, F, Ho, Wi)[:, :, :, :Wo]
    return out.astype(x.dtype)


if __name__ == "__main__":
    # Small config consistent with the module: batch=2, channels=4, 16x16 input,
    # num_filters=8, filter_size=3, stride=1, pad=0, tied biases, ReLU, flipped.
    N, C, H, Wi = 2, 4, 16, 16
    F, KH, KW = 8, 3, 3

    key = jax.random.PRNGKey(0)
    kx, kw, kb = jax.random.split(key, 3)

    x = jax.random.normal(kx, (N, C, H, Wi), dtype=jnp.float32)
    # Deterministic Glorot-uniform-like init for W (shape from get_W_shape()).
    fan_in = C * KH * KW
    fan_out = F * KH * KW
    limit = (6.0 / (fan_in + fan_out)) ** 0.5
    W = jax.random.uniform(kw, (F, C, KH, KW), dtype=jnp.float32,
                           minval=-limit, maxval=limit)
    b = 0.1 * jax.random.normal(kb, (F,), dtype=jnp.float32)

    # tile_m=128 -> 2 row tiles per batch element (grid = (2, 2)); exercises the
    # multi-tile path and the megacore-parallel row-tile axis.
    out = base_conv_layer_forward(x, W, b, tile_m=128)
    out = jax.block_until_ready(out)

    # Reference: true convolution (flipped filters) + bias + ReLU, f32, NCHW.
    Wf = W[:, :, ::-1, ::-1]
    ref = jax.lax.conv_general_dilated(
        x, Wf, window_strides=(1, 1), padding="VALID",
        dimension_numbers=("NCHW", "OIHW", "NCHW"))
    ref = jnp.maximum(ref + b[None, :, None, None], 0.0)

    assert out.shape == (N, F, H - KH + 1, Wi - KW + 1)
    # bf16 MXU inputs + bf16 output -> relaxed tolerance vs. the f32 reference.
    assert jnp.allclose(out, ref, atol=5e-2, rtol=5e-2), \
        float(jnp.max(jnp.abs(out - ref)))
    print("KERNEL_OK")
</pallas_src>

<mosaic_0001>
module attributes {stable_mosaic.version = 11 : i64} {
  func.func @kernel(%arg0: i32, %arg1: i32, %arg2: memref<1x4x384xbf16, #tpu.memory_space<vmem>>, %arg3: memref<9x8x4xbf16, #tpu.memory_space<vmem>>, %arg4: memref<8x1xf32, #tpu.memory_space<vmem>>, %arg5: memref<1x8x128xbf16, #tpu.memory_space<vmem>>) attributes {dimension_semantics = [#tpu.dimension_semantics<parallel>, #tpu.dimension_semantics<parallel>], iteration_bounds = array<i64: 2, 2>, scalar_prefetch = 0 : i64, scratch_operands = 0 : i64, tpu.core_type = #tpu.core_type<tc>, window_params = [{transform_indices = @transform_0, window_bounds = array<i64: 1, 4, 384>}, {pipeline_mode = #tpu.pipeline_mode<synchronous>, transform_indices = @transform_1, window_bounds = array<i64: 9, 8, 4>}, {pipeline_mode = #tpu.pipeline_mode<synchronous>, transform_indices = @transform_2, window_bounds = array<i64: 8, 1>}, {transform_indices = @transform_3, window_bounds = array<i64: 1, 8, 128>}]} {
    %c128_i32 = arith.constant 128 : i32
    %0 = arith.muli %arg1, %c128_i32 : i32
    %1 = tpu.assume_multiple %0, 128 : i32
    %c0 = arith.constant 0 : index
    %c0_0 = arith.constant 0 : index
    %2 = arith.index_cast %1 : i32 to index
    %3 = vector.load %arg2[%c0, %c0_0, %2] : memref<1x4x384xbf16, #tpu.memory_space<vmem>>, vector<1x4x256xbf16>
    %4 = vector.shape_cast %3 : vector<1x4x256xbf16> to vector<4x256xbf16>
    %cst = arith.constant 0.000000e+00 : f32
    %5 = vector.broadcast %cst : f32 to vector<8x128xf32>
    %6 = vector.extract_strided_slice %4 {offsets = [0, 0], sizes = [4, 128], strides = [1, 1]} : vector<4x256xbf16> to vector<4x128xbf16>
    %c0_1 = arith.constant 0 : index
    %c0_2 = arith.constant 0 : index
    %c0_3 = arith.constant 0 : index
    %7 = vector.load %arg3[%c0_1, %c0_2, %c0_3] : memref<9x8x4xbf16, #tpu.memory_space<vmem>>, vector<1x8x4xbf16>
    %8 = vector.shape_cast %7 : vector<1x8x4xbf16> to vector<8x4xbf16>
    %cst_4 = arith.constant dense<0.000000e+00> : vector<8x128xf32>
    %9 = tpu.matmul %8, %6, %cst_4 {dimension_numbers = #tpu.dot_dimension_numbers<[1], [0], [0], [1], [0, 0, 1, 1], [], []>} : vector<8x4xbf16>, vector<4x128xbf16>, vector<8x128xf32> -> vector<8x128xf32>
    %10 = arith.addf %5, %9 : vector<8x128xf32>
    %11 = vector.extract_strided_slice %4 {offsets = [0, 1], sizes = [4, 128], strides = [1, 1]} : vector<4x256xbf16> to vector<4x128xbf16>
    %c1 = arith.constant 1 : index
    %c0_5 = arith.constant 0 : index
    %c0_6 = arith.constant 0 : index
    %12 = vector.load %arg3[%c1, %c0_5, %c0_6] : memref<9x8x4xbf16, #tpu.memory_space<vmem>>, vector<1x8x4xbf16>
    %13 = vector.shape_cast %12 : vector<1x8x4xbf16> to vector<8x4xbf16>
    %cst_7 = arith.constant dense<0.000000e+00> : vector<8x128xf32>
    %14 = tpu.matmul %13, %11, %cst_7 {dimension_numbers = #tpu.dot_dimension_numbers<[1], [0], [0], [1], [0, 0, 1, 1], [], []>} : vector<8x4xbf16>, vector<4x128xbf16>, vector<8x128xf32> -> vector<8x128xf32>
    %15 = arith.addf %10, %14 : vector<8x128xf32>
    %16 = vector.extract_strided_slice %4 {offsets = [0, 2], sizes = [4, 128], strides = [1, 1]} : vector<4x256xbf16> to vector<4x128xbf16>
    %c2 = arith.constant 2 : index
    %c0_8 = arith.constant 0 : index
    %c0_9 = arith.constant 0 : index
    %17 = vector.load %arg3[%c2, %c0_8, %c0_9] : memref<9x8x4xbf16, #tpu.memory_space<vmem>>, vector<1x8x4xbf16>
    %18 = vector.shape_cast %17 : vector<1x8x4xbf16> to vector<8x4xbf16>
    %cst_10 = arith.constant dense<0.000000e+00> : vector<8x128xf32>
    %19 = tpu.matmul %18, %16, %cst_10 {dimension_numbers = #tpu.dot_dimension_numbers<[1], [0], [0], [1], [0, 0, 1, 1], [], []>} : vector<8x4xbf16>, vector<4x128xbf16>, vector<8x128xf32> -> vector<8x128xf32>
    %20 = arith.addf %15, %19 : vector<8x128xf32>
    %21 = vector.extract_strided_slice %4 {offsets = [0, 16], sizes = [4, 128], strides = [1, 1]} : vector<4x256xbf16> to vector<4x128xbf16>
    %c3 = arith.constant 3 : index
    %c0_11 = arith.constant 0 : index
    %c0_12 = arith.constant 0 : index
    %22 = vector.load %arg3[%c3, %c0_11, %c0_12] : memref<9x8x4xbf16, #tpu.memory_space<vmem>>, vector<1x8x4xbf16>
    %23 = vector.shape_cast %22 : vector<1x8x4xbf16> to vector<8x4xbf16>
    %cst_13 = arith.constant dense<0.000000e+00> : vector<8x128xf32>
    %24 = tpu.matmul %23, %21, %cst_13 {dimension_numbers = #tpu.dot_dimension_numbers<[1], [0], [0], [1], [0, 0, 1, 1], [], []>} : vector<8x4xbf16>, vector<4x128xbf16>, vector<8x128xf32> -> vector<8x128xf32>
    %25 = arith.addf %20, %24 : vector<8x128xf32>
    %26 = vector.extract_strided_slice %4 {offsets = [0, 17], sizes = [4, 128], strides = [1, 1]} : vector<4x256xbf16> to vector<4x128xbf16>
    %c4 = arith.constant 4 : index
    %c0_14 = arith.constant 0 : index
    %c0_15 = arith.constant 0 : index
    %27 = vector.load %arg3[%c4, %c0_14, %c0_15] : memref<9x8x4xbf16, #tpu.memory_space<vmem>>, vector<1x8x4xbf16>
    %28 = vector.shape_cast %27 : vector<1x8x4xbf16> to vector<8x4xbf16>
    %cst_16 = arith.constant dense<0.000000e+00> : vector<8x128xf32>
    %29 = tpu.matmul %28, %26, %cst_16 {dimension_numbers = #tpu.dot_dimension_numbers<[1], [0], [0], [1], [0, 0, 1, 1], [], []>} : vector<8x4xbf16>, vector<4x128xbf16>, vector<8x128xf32> -> vector<8x128xf32>
    %30 = arith.addf %25, %29 : vector<8x128xf32>
    %31 = vector.extract_strided_slice %4 {offsets = [0, 18], sizes = [4, 128], strides = [1, 1]} : vector<4x256xbf16> to vector<4x128xbf16>
    %c5 = arith.constant 5 : index
    %c0_17 = arith.constant 0 : index
    %c0_18 = arith.constant 0 : index
    %32 = vector.load %arg3[%c5, %c0_17, %c0_18] : memref<9x8x4xbf16, #tpu.memory_space<vmem>>, vector<1x8x4xbf16>
    %33 = vector.shape_cast %32 : vector<1x8x4xbf16> to vector<8x4xbf16>
    %cst_19 = arith.constant dense<0.000000e+00> : vector<8x128xf32>
    %34 = tpu.matmul %33, %31, %cst_19 {dimension_numbers = #tpu.dot_dimension_numbers<[1], [0], [0], [1], [0, 0, 1, 1], [], []>} : vector<8x4xbf16>, vector<4x128xbf16>, vector<8x128xf32> -> vector<8x128xf32>
    %35 = arith.addf %30, %34 : vector<8x128xf32>
    %36 = vector.extract_strided_slice %4 {offsets = [0, 32], sizes = [4, 128], strides = [1, 1]} : vector<4x256xbf16> to vector<4x128xbf16>
    %c6 = arith.constant 6 : index
    %c0_20 = arith.constant 0 : index
    %c0_21 = arith.constant 0 : index
    %37 = vector.load %arg3[%c6, %c0_20, %c0_21] : memref<9x8x4xbf16, #tpu.memory_space<vmem>>, vector<1x8x4xbf16>
    %38 = vector.shape_cast %37 : vector<1x8x4xbf16> to vector<8x4xbf16>
    %cst_22 = arith.constant dense<0.000000e+00> : vector<8x128xf32>
    %39 = tpu.matmul %38, %36, %cst_22 {dimension_numbers = #tpu.dot_dimension_numbers<[1], [0], [0], [1], [0, 0, 1, 1], [], []>} : vector<8x4xbf16>, vector<4x128xbf16>, vector<8x128xf32> -> vector<8x128xf32>
    %40 = arith.addf %35, %39 : vector<8x128xf32>
    %41 = vector.extract_strided_slice %4 {offsets = [0, 33], sizes = [4, 128], strides = [1, 1]} : vector<4x256xbf16> to vector<4x128xbf16>
    %c7 = arith.constant 7 : index
    %c0_23 = arith.constant 0 : index
    %c0_24 = arith.constant 0 : index
    %42 = vector.load %arg3[%c7, %c0_23, %c0_24] : memref<9x8x4xbf16, #tpu.memory_space<vmem>>, vector<1x8x4xbf16>
    %43 = vector.shape_cast %42 : vector<1x8x4xbf16> to vector<8x4xbf16>
    %cst_25 = arith.constant dense<0.000000e+00> : vector<8x128xf32>
    %44 = tpu.matmul %43, %41, %cst_25 {dimension_numbers = #tpu.dot_dimension_numbers<[1], [0], [0], [1], [0, 0, 1, 1], [], []>} : vector<8x4xbf16>, vector<4x128xbf16>, vector<8x128xf32> -> vector<8x128xf32>
    %45 = arith.addf %40, %44 : vector<8x128xf32>
    %46 = vector.extract_strided_slice %4 {offsets = [0, 34], sizes = [4, 128], strides = [1, 1]} : vector<4x256xbf16> to vector<4x128xbf16>
    %c8 = arith.constant 8 : index
    %c0_26 = arith.constant 0 : index
    %c0_27 = arith.constant 0 : index
    %47 = vector.load %arg3[%c8, %c0_26, %c0_27] : memref<9x8x4xbf16, #tpu.memory_space<vmem>>, vector<1x8x4xbf16>
    %48 = vector.shape_cast %47 : vector<1x8x4xbf16> to vector<8x4xbf16>
    %cst_28 = arith.constant dense<0.000000e+00> : vector<8x128xf32>
    %49 = tpu.matmul %48, %46, %cst_28 {dimension_numbers = #tpu.dot_dimension_numbers<[1], [0], [0], [1], [0, 0, 1, 1], [], []>} : vector<8x4xbf16>, vector<4x128xbf16>, vector<8x128xf32> -> vector<8x128xf32>
    %50 = arith.addf %45, %49 : vector<8x128xf32>
    %c0_29 = arith.constant 0 : index
    %c0_30 = arith.constant 0 : index
    %51 = vector.load %arg4[%c0_29, %c0_30] : memref<8x1xf32, #tpu.memory_space<vmem>>, vector<8x1xf32>
    %52 = vector.broadcast %51 : vector<8x1xf32> to vector<8x128xf32>
    %53 = arith.addf %50, %52 : vector<8x128xf32>
    %cst_31 = arith.constant 0.000000e+00 : f32
    %54 = vector.broadcast %cst_31 : f32 to vector<8x128xf32>
    %55 = arith.maximumf %53, %54 : vector<8x128xf32>
    %56 = arith.truncf %55 : vector<8x128xf32> to vector<8x128xbf16>
    %c0_32 = arith.constant 0 : index
    %c0_33 = arith.constant 0 : index
    %c0_34 = arith.constant 0 : index
    %57 = vector.load %arg5[%c0_32, %c0_33, %c0_34] : memref<1x8x128xbf16, #tpu.memory_space<vmem>>, vector<1x8x128xbf16>
    %58 = vector.shape_cast %57 : vector<1x8x128xbf16> to vector<8x128xbf16>
    %59 = vector.shape_cast %56 : vector<8x128xbf16> to vector<1x8x128xbf16>
    tpu.vector_store %arg5[%c0_32, %c0_33, %c0_34], %59 {strides = array<i32>} : memref<1x8x128xbf16, #tpu.memory_space<vmem>>, vector<1x8x128xbf16>,
    return
  }
  func.func @transform_0(%arg0: i32, %arg1: i32) -> (i32, i32, i32) {
    %c0_i32 = arith.constant 0 : i32
    %c0_i32_0 = arith.constant 0 : i32
    %c0_i32_1 = arith.constant 0 : i32
    return %arg0, %c0_i32, %c0_i32_0 : i32, i32, i32
  }
  func.func @transform_1(%arg0: i32, %arg1: i32) -> (i32, i32, i32) {
    %c0_i32 = arith.constant 0 : i32
    %c0_i32_0 = arith.constant 0 : i32
    %c0_i32_1 = arith.constant 0 : i32
    %c0_i32_2 = arith.constant 0 : i32
    return %c0_i32, %c0_i32_0, %c0_i32_1 : i32, i32, i32
  }
  func.func @transform_2(%arg0: i32, %arg1: i32) -> (i32, i32) {
    %c0_i32 = arith.constant 0 : i32
    %c0_i32_0 = arith.constant 0 : i32
    %c0_i32_1 = arith.constant 0 : i32
    return %c0_i32, %c0_i32_0 : i32, i32
  }
  func.func @transform_3(%arg0: i32, %arg1: i32) -> (i32, i32, i32) {
    %c0_i32 = arith.constant 0 : i32
    %c0_i32_0 = arith.constant 0 : i32
    return %arg0, %c0_i32, %arg1 : i32, i32, i32
  }
}

</mosaic_0001>

<llo_original>
// kernel: tpu_custom_call.1
$region0: #{tpu_custom_call.1}
  #allocation0 [shape = 'u32[]', space=smem, size = 0x4, offset = 0x4, fixed_abs, tag = 'smem constant byte address 0x4 - core index']
  #allocation1 [shape = 'u32[144,128]{1,0:T(1,128)}', space=vmem, size = 0x12000, scoped, tag = 'internal scratch']
  %s0 = inlined_call_operand.vmem [shape: bf16[2,4,384], index: 0, kind: input, shape index: {}]
  %s1 = inlined_call_operand.vmem [shape: bf16[9,8,4], index: 1, kind: input, shape index: {}]
  %s2 = inlined_call_operand.vmem [shape: f32[8,1], index: 2, kind: input, shape index: {}]
  %s3 = inlined_call_operand.hbm [shape: bf16[2,8,256], index: 3, kind: output, shape index: {}]
  %s4 = sld [smem:[#allocation0]]
  $region45: #{tpu_custom_call.1} parent=0
    _
  %s6 = ssub.s32 1, %s4
  %s7 = scalar_select 0, %s6, %s4
  $region1: #{tpu_custom_call.1} parent=0
    #allocation2 [shape = 'u8[4096]{0}', space=vmem, size = 0x1000, scoped, tag = 'output window, operand 0']
    #allocation3 [shape = 's32[2]{0}', space=sflag, size = 0x8, scoped, tag = 'scoped memory for tpu_custom_call.1']
    %8 = vsyncpa [#allocation3], 0
    %s9 = scalar_lea.sflag [#allocation3], 1
    %10 = vsyncpa %s9, 0
    loop: start=0, step=1, limit=6
    $region2: #{tpu_custom_call.1} parent=1 // loop_pre_header
      _
    $region3: #{tpu_custom_call.1} parent=1 // loop_header
      %s12 = sphi 0, %s16
      %p13 = scmp.ge.s32.totalorder %s12, 6
      %s19 = sphi 0, %s31
      %s20 = sphi 0, %s27
      %s21 = sphi 0, %s19
      %s22 = sphi 0, %s20
      %s23 = sphi 0, %s21
      %s24 = sphi 0, %s22
      %s34 = sphi 0, %s36
      %s37 = sphi 0, %s34
      %s38 = sphi 0, %s37
      %s54 = sphi 0, %s38
      %s58 = sphi 0, %s58
      %s60 = sphi 0, %s58
      %s61 = sphi 0, %s60
      %s75 = sphi 0, %s61
      %s79 = sphi 0, %s79
      %s81 = sphi 0, %s79
      %s82 = sphi 0, %s81
      %s96 = sphi 0, %s82
      %s104 = sphi 0, %s106
      %s107 = sphi 0, %s104
      %s108 = sphi 0, %s107
      %s124 = sphi 0, %s108
    $region4: #{tpu_custom_call.1} parent=1 // loop_header_branch
      %15 = sbr.rel (%p13) target = $region8
    $region5: #{tpu_custom_call.1} parent=1 // loop_body
      %s17 = ssub.s32 %s12, 1
      %s18 = ssub.s32 %s12, 2
      %s25 = sadd.s32 1, %s20
      %p26 = scmp.ge.s32.totalorder %s25, 2
      %s27 = scalar_select %p26, 0, %s25
      %s28 = sadd.s32 1, %s19
      %s29 = scalar_select %p26, %s28, %s19
      %p30 = scmp.ge.s32.totalorder %s29, 2
      %s31 = scalar_select %p30, 0, %s29
      %s32 = ssub.s32 %s19, %s31
      %p33 = scmp.eq.s32.totalorder %s32, 0
      %s35 = sadd.s32 %s34, 1
      %s36 = scalar_select %p33, %s34, %s35
      %p39 = pneg %p33
      %p40 = scmp.eq.s32.totalorder %s12, 3
      %p41 = por %p39, %p40
      %p42 = scmp.ne.s32.totalorder %s34, %s37
      %p43 = scmp.eq.s32.totalorder %s12, 0
      %p44 = por %p42, %p43
      %p45 = scmp.ne.s32.totalorder %s34, %s37
      %p46 = scmp.eq.s32.totalorder %s17, 3
      %p47 = por %p45, %p46
      %p48 = scmp.ne.s32.totalorder %s37, %s38
      %p49 = scmp.eq.s32.totalorder %s17, 0
      %p50 = por %p48, %p49
      %p51 = scmp.ne.s32.totalorder %s37, %s38
      %p52 = scmp.eq.s32.totalorder %s18, 3
      %p53 = por %p51, %p52
      %p55 = scmp.ne.s32.totalorder %s38, %s54
      %p56 = scmp.eq.s32.totalorder %s18, 0
      %p57 = por %p55, %p56
      %s59 = sadd.s32 %s58, 1
      %p62 = scmp.eq.s32.totalorder %s12, 3
      %p63 = scmp.ne.s32.totalorder %s58, %s60
      %p64 = scmp.eq.s32.totalorder %s12, 0
      %p65 = por %p63, %p64
      %p66 = scmp.ne.s32.totalorder %s58, %s60
      %p67 = scmp.eq.s32.totalorder %s17, 3
      %p68 = por %p66, %p67
      %p69 = scmp.ne.s32.totalorder %s60, %s61
      %p70 = scmp.eq.s32.totalorder %s17, 0
      %p71 = por %p69, %p70
      %p72 = scmp.ne.s32.totalorder %s60, %s61
      %p73 = scmp.eq.s32.totalorder %s18, 3
      %p74 = por %p72, %p73
      %p76 = scmp.ne.s32.totalorder %s61, %s75
      %p77 = scmp.eq.s32.totalorder %s18, 0
      %p78 = por %p76, %p77
      %s80 = sadd.s32 %s79, 1
      %p83 = scmp.eq.s32.totalorder %s12, 3
      %p84 = scmp.ne.s32.totalorder %s79, %s81
      %p85 = scmp.eq.s32.totalorder %s12, 0
      %p86 = por %p84, %p85
      %p87 = scmp.ne.s32.totalorder %s79, %s81
      %p88 = scmp.eq.s32.totalorder %s17, 3
      %p89 = por %p87, %p88
      %p90 = scmp.ne.s32.totalorder %s81, %s82
      %p91 = scmp.eq.s32.totalorder %s17, 0
      %p92 = por %p90, %p91
      %p93 = scmp.ne.s32.totalorder %s81, %s82
      %p94 = scmp.eq.s32.totalorder %s18, 3
      %p95 = por %p93, %p94
      %p97 = scmp.ne.s32.totalorder %s82, %s96
      %p98 = scmp.eq.s32.totalorder %s18, 0
      %p99 = por %p97, %p98
      %s100 = ssub.s32 %s19, %s31
      %s101 = ssub.s32 %s20, %s27
      %s102 = sor.u32 %s100, %s101
      %p103 = scmp.eq.s32.totalorder %s102, 0
      %s105 = sadd.s32 %s104, 1
      %s106 = scalar_select %p103, %s104, %s105
      %p109 = pneg %p103
      %p110 = scmp.eq.s32.totalorder %s12, 3
      %p111 = por %p109, %p110
      %p112 = scmp.ne.s32.totalorder %s104, %s107
      %p113 = scmp.eq.s32.totalorder %s12, 0
      %p114 = por %p112, %p113
      %p115 = scmp.ne.s32.totalorder %s104, %s107
      %p116 = scmp.eq.s32.totalorder %s17, 3
      %p117 = por %p115, %p116
      %p118 = scmp.ne.s32.totalorder %s107, %s108
      %p119 = scmp.eq.s32.totalorder %s17, 0
      %p120 = por %p118, %p119
      %p121 = scmp.ne.s32.totalorder %s107, %s108
      %p122 = scmp.eq.s32.totalorder %s18, 3
      %p123 = por %p121, %p122
      %p125 = scmp.ne.s32.totalorder %s108, %s124
      %p126 = scmp.eq.s32.totalorder %s18, 0
      %p127 = por %p125, %p126
      %p128 = scmp.le.s32.totalorder 1, %s12
      %p129 = scmp.lt.s32.totalorder %s12, 5
      %p130 = pnand %p128, %p129
      %p131 = pneg %p130
      // Predicated region
      $region9: #{tpu_custom_call.1} parent=5 // pred_check
        _
      $region10: #{tpu_custom_call.1} parent=5 // pred_check_branch
        %133 = sbr.rel (%p130) target = $region12
      $region11: #{tpu_custom_call.1} parent=5 // pred_region
        %s134 = ssub.s32 %s12, 1
        // Predicated region
        $region13: #{tpu_custom_call.1} parent=11 // pred_check
          %p135 = pneg %p71
        $region14: #{tpu_custom_call.1} parent=11 // pred_check_branch
          %137 = sbr.rel (%p135) target = $region16
        $region15: #{tpu_custom_call.1} parent=11 // pred_region
          _
        $region16: #{tpu_custom_call.1} parent=11 // pred_fallthru
          _
        // Predicated region
        $region17: #{tpu_custom_call.1} parent=11 // pred_check
          %p138 = pneg %p92
        $region18: #{tpu_custom_call.1} parent=11 // pred_check_branch
          %140 = sbr.rel (%p138) target = $region20
        $region19: #{tpu_custom_call.1} parent=11 // pred_region
          _
        $region20: #{tpu_custom_call.1} parent=11 // pred_fallthru
          _
      $region12: #{tpu_custom_call.1} parent=5 // pred_fallthru
        _
      %p141 = scmp.lt.s32.totalorder %s12, 4
      // Predicated region
      $region21: #{tpu_custom_call.1} parent=5 // pred_check
        %p142 = pneg %p141
      $region22: #{tpu_custom_call.1} parent=5 // pred_check_branch
        %144 = sbr.rel (%p142) target = $region24
      $region23: #{tpu_custom_call.1} parent=5 // pred_region
        // Predicated region
        $region25: #{tpu_custom_call.1} parent=23 // pred_check
          %p145 = pneg %p44
        $region26: #{tpu_custom_call.1} parent=23 // pred_check_branch
          %147 = sbr.rel (%p145) target = $region28
        $region27: #{tpu_custom_call.1} parent=23 // pred_region
          %p148 = scmp.lt.s32.totalorder %s19, 1
          %s149 = scalar_select %p148, %s19, 1
          %s150 = smul.addr %s149, 3
          %s151 = smul.addr %s150, 2
          %s152 = scalar_lea.vmem %s0, %s151
        $region28: #{tpu_custom_call.1} parent=23 // pred_fallthru
          _
      $region24: #{tpu_custom_call.1} parent=5 // pred_fallthru
        _
      %p153 = scmp.le.s32.totalorder 1, %s12
      %p154 = scmp.lt.s32.totalorder %s12, 5
      %p155 = pnand %p153, %p154
      %p156 = pneg %p155
      // Predicated region
      $region29: #{tpu_custom_call.1} parent=5 // pred_check
        _
      $region30: #{tpu_custom_call.1} parent=5 // pred_check_branch
        %158 = sbr.rel (%p155) target = $region32
      $region31: #{tpu_custom_call.1} parent=5 // pred_region
        %s159 = ssub.s32 %s12, 1
        %p160 = scmp.lt.s32.totalorder %s21, 1
        %s161 = scalar_select %p160, %s21, 1
        %s162 = smul.addr %s161, 3
        %s163 = smul.addr %s162, 2
        %s164 = scalar_lea.vmem %s0, %s163
        %p165 = pneg %p50
        %p166 = pneg %p47
        %p167 = pneg %p71
        %p168 = pneg %p68
        %p169 = pneg %p92
        %p170 = pneg %p89
        %p171 = pneg %p120
        %p172 = pneg %p117
        %s173 = sand.u32 %s107, 1
        %s174 = scalar_lea.sflag [#allocation3], %s173
        %s175 = sand.u32 %s107, 1
        %s176 = smul.addr %s175, 4
        %s177 = scalar_lea.vmem [#allocation2], %s176
        %p178 = scmp.lt.s32.totalorder %s21, 1
        %s179 = scalar_select %p178, %s21, 1
        %s180 = smul.addr %s179, 3
        %s181 = smul.addr %s180, 2
        %s182 = scalar_lea.vmem %s0, %s181
        %s184 = smul.u32 %s22, 128
        %s185 = sshra.s32 %s184, 7
        %s186 = sand.u32 %s184, 127
        %s187 = smul.addr %s185, 2
        %s188 = scalar_lea.vmem %s182, %s187
        %v189 = vld [vmem:[%s188] sm:$0xf]
        %v190 = vld [vmem:[%s1] sm:$0xf]
        %s191 = scalar_lea.vmem %s1, 4
        %v192 = vld [vmem:[%s191] sm:$0xf]
        %v195 = vunpack.c.l.s4 1983009808
        %v196 = vunpack.c.0.s8 %v195
        %v197 = vlaneseq
        %v198 = vshrl.u32 %v197, 7
        %v199 = vsub.s32 %v196, %v198
        %v200 = vrot.slane %v189, %v199
        %v201 = vcombine.high %v200, %v200
        %202 = vrot.lane.b32.xlu0 %v200, 127
        %v203 = vpop.permute.xlu0 %202
        %204 = vrot.lane.b32.xlu0 %v201, 127
        %v205 = vpop.permute.xlu0 %204
        %vm206 = vcmask 1039360
        %v207 = vsel %vm206, %v203, %v205
        %vm208 = vcmask 31744
        %v210 = vsel %vm208, %v192, 0
        %vm212 = vcmask 1041408
        %v214 = vsel %vm212, %v207, 0
        %216 = vmatprep.subr.bf16.mxu0 0
        %217 = vmatpush1.bf16.msra.mxu0 0
        %218 = vmatprep.subr.bf16.mxu0 0
        %219 = vmatpush1.bf16.msra.mxu0 0
        %220 = vmatprep.subr.bf16.mxu0 0
        %221 = vmatpush1.bf16.msra.mxu0 0
        %222 = vmatprep.subr.bf16.mxu0 0
        %223 = vmatpush1.bf16.msra.mxu0 0
        %224 = vmatprep.subr.bf16.mxu0 0
        %225 = vmatpush1.bf16.msra.mxu0 0
        %226 = vmatprep.subr.bf16.mxu0 0
        %227 = vmatpush1.bf16.msra.mxu0 0
        %228 = vmatprep.subr.bf16.mxu0 0
        %229 = vmatpush1.bf16.msra.mxu0 0
        %230 = vmatprep.subr.bf16.mxu0 0
        %231 = vmatpush1.bf16.msra.mxu0 %v214
        %232 = vmatprep.subr.bf16.mxu0 0
        %233 = vmatpush2.bf16.msra.mxu0 0
        %234 = vmatprep.subr.bf16.mxu0 0
        %235 = vmatpush2.bf16.msra.mxu0 0
        %236 = vmatprep.subr.bf16.mxu0 0
        %237 = vmatpush2.bf16.msra.mxu0 0
        %238 = vmatprep.subr.bf16.mxu0 0
        %239 = vmatpush2.bf16.msra.mxu0 0
        %240 = vmatprep.subr.bf16.mxu0 0
        %241 = vmatpush2.bf16.msra.mxu0 0
        %242 = vmatprep.subr.bf16.mxu0 0
        %243 = vmatpush2.bf16.msra.mxu0 0
        %244 = vmatprep.subr.bf16.mxu0 0
        %245 = vmatpush2.bf16.msra.mxu0 0
        %246 = vmatprep.subr.bf16.mxu0 0
        %247 = vmatpush2.bf16.msra.mxu0 0
        %248 = vmatprep.mubr.bf16.mxu0 0
        %249 = vmatmul.mubr.bf16.gmra.mxu0 %v210
        %v250 = vpop.f32.mrf.mxu0
        %v251 = vadd.f32 0.0, %v250
        %v252 = vpop.f32.mrf.mxu0
        %v253 = vpop.f32.mrf.mxu0
        %v254 = vpop.f32.mrf.mxu0
        %255 = vdwg.mxu0
        %v257 = vsel %vm208, %v190, 0
        %v260 = vsel %vm212, %v189, 0
        %262 = vmatprep.subr.bf16.mxu0 0
        %263 = vmatpush1.bf16.msra.mxu0 0
        %264 = vmatprep.subr.bf16.mxu0 0
        %265 = vmatpush1.bf16.msra.mxu0 0
        %266 = vmatprep.subr.bf16.mxu0 0
        %267 = vmatpush1.bf16.msra.mxu0 0
        %268 = vmatprep.subr.bf16.mxu0 0
        %269 = vmatpush1.bf16.msra.mxu0 0
        %270 = vmatprep.subr.bf16.mxu0 0
        %271 = vmatpush1.bf16.msra.mxu0 0
        %272 = vmatprep.subr.bf16.mxu0 0
        %273 = vmatpush1.bf16.msra.mxu0 0
        %274 = vmatprep.subr.bf16.mxu0 0
        %275 = vmatpush1.bf16.msra.mxu0 0
        %276 = vmatprep.subr.bf16.mxu0 0
        %277 = vmatpush1.bf16.msra.mxu0 %v260
        %278 = vmatprep.subr.bf16.mxu0 0
        %279 = vmatpush2.bf16.msra.mxu0 0
        %280 = vmatprep.subr.bf16.mxu0 0
        %281 = vmatpush2.bf16.msra.mxu0 0
        %282 = vmatprep.subr.bf16.mxu0 0
        %283 = vmatpush2.bf16.msra.mxu0 0
        %284 = vmatprep.subr.bf16.mxu0 0
        %285 = vmatpush2.bf16.msra.mxu0 0
        %286 = vmatprep.subr.bf16.mxu0 0
        %287 = vmatpush2.bf16.msra.mxu0 0
        %288 = vmatprep.subr.bf16.mxu0 0
        %289 = vmatpush2.bf16.msra.mxu0 0
        %290 = vmatprep.subr.bf16.mxu0 0
        %291 = vmatpush2.bf16.msra.mxu0 0
        %292 = vmatprep.subr.bf16.mxu0 0
        %293 = vmatpush2.bf16.msra.mxu0 0
        %294 = vmatprep.mubr.bf16.mxu0 0
        %295 = vmatmul.mubr.bf16.gmra.mxu0 %v257
        %v296 = vpop.f32.mrf.mxu0
        %v297 = vadd.f32 %v251, %v296
        %v298 = vpop.f32.mrf.mxu0
        %v299 = vpop.f32.mrf.mxu0
        %v300 = vpop.f32.mrf.mxu0
        %301 = vdwg.mxu0
        %s302 = scalar_lea.vmem %s1, 8
        %v303 = vld [vmem:[%s302] sm:$0xf]
        %304 = vrot.lane.b32.xlu0 %v200, 126
        %v305 = vpop.permute.xlu0 %304
        %306 = vrot.lane.b32.xlu0 %v201, 126
        %v307 = vpop.permute.xlu0 %306
        %vm308 = vcmask 1031168
        %v309 = vsel %vm308, %v305, %v307
        %v311 = vsel %vm208, %v303, 0
        %v314 = vsel %vm212, %v309, 0
        %316 = vmatprep.subr.bf16.mxu0 0
        %317 = vmatpush1.bf16.msra.mxu0 0
        %318 = vmatprep.subr.bf16.mxu0 0
        %319 = vmatpush1.bf16.msra.mxu0 0
        %320 = vmatprep.subr.bf16.mxu0 0
        %321 = vmatpush1.bf16.msra.mxu0 0
        %322 = vmatprep.subr.bf16.mxu0 0
        %323 = vmatpush1.bf16.msra.mxu0 0
        %324 = vmatprep.subr.bf16.mxu0 0
        %325 = vmatpush1.bf16.msra.mxu0 0
        %326 = vmatprep.subr.bf16.mxu0 0
        %327 = vmatpush1.bf16.msra.mxu0 0
        %328 = vmatprep.subr.bf16.mxu0 0
        %329 = vmatpush1.bf16.msra.mxu0 0
        %330 = vmatprep.subr.bf16.mxu0 0
        %331 = vmatpush1.bf16.msra.mxu0 %v314
        %332 = vmatprep.subr.bf16.mxu0 0
        %333 = vmatpush2.bf16.msra.mxu0 0
        %334 = vmatprep.subr.bf16.mxu0 0
        %335 = vmatpush2.bf16.msra.mxu0 0
        %336 = vmatprep.subr.bf16.mxu0 0
        %337 = vmatpush2.bf16.msra.mxu0 0
        %338 = vmatprep.subr.bf16.mxu0 0
        %339 = vmatpush2.bf16.msra.mxu0 0
        %340 = vmatprep.subr.bf16.mxu0 0
        %341 = vmatpush2.bf16.msra.mxu0 0
        %342 = vmatprep.subr.bf16.mxu0 0
        %343 = vmatpush2.bf16.msra.mxu0 0
        %344 = vmatprep.subr.bf16.mxu0 0
        %345 = vmatpush2.bf16.msra.mxu0 0
        %346 = vmatprep.subr.bf16.mxu0 0
        %347 = vmatpush2.bf16.msra.mxu0 0
        %348 = vmatprep.mubr.bf16.mxu0 0
        %349 = vmatmul.mubr.bf16.gmra.mxu0 %v311
        %v350 = vpop.f32.mrf.mxu0
        %v351 = vadd.f32 0.0, %v350
        %v352 = vpop.f32.mrf.mxu0
        %v353 = vpop.f32.mrf.mxu0
        %v354 = vpop.f32.mrf.mxu0
        %355 = vdwg.mxu0
        %v356 = vadd.f32 %v297, %v351
        %s357 = scalar_lea.vmem %s1, 12
        %v358 = vld [vmem:[%s357] sm:$0xf]
        %359 = vrot.lane.b32.xlu0 %v200, 112
        %v360 = vpop.permute.xlu0 %359
        %361 = vrot.lane.b32.xlu0 %v201, 112
        %v362 = vpop.permute.xlu0 %361
        %vm363 = vcmask 916480
        %v364 = vsel %vm363, %v360, %v362
        %v366 = vsel %vm208, %v358, 0
        %v369 = vsel %vm212, %v364, 0
        %371 = vmatprep.subr.bf16.mxu0 0
        %372 = vmatpush1.bf16.msra.mxu0 0
        %373 = vmatprep.subr.bf16.mxu0 0
        %374 = vmatpush1.bf16.msra.mxu0 0
        %375 = vmatprep.subr.bf16.mxu0 0
        %376 = vmatpush1.bf16.msra.mxu0 0
        %377 = vmatprep.subr.bf16.mxu0 0
        %378 = vmatpush1.bf16.msra.mxu0 0
        %379 = vmatprep.subr.bf16.mxu0 0
        %380 = vmatpush1.bf16.msra.mxu0 0
        %381 = vmatprep.subr.bf16.mxu0 0
        %382 = vmatpush1.bf16.msra.mxu0 0
        %383 = vmatprep.subr.bf16.mxu0 0
        %384 = vmatpush1.bf16.msra.mxu0 0
        %385 = vmatprep.subr.bf16.mxu0 0
        %386 = vmatpush1.bf16.msra.mxu0 %v369
        %387 = vmatprep.subr.bf16.mxu0 0
        %388 = vmatpush2.bf16.msra.mxu0 0
        %389 = vmatprep.subr.bf16.mxu0 0
        %390 = vmatpush2.bf16.msra.mxu0 0
        %391 = vmatprep.subr.bf16.mxu0 0
        %392 = vmatpush2.bf16.msra.mxu0 0
        %393 = vmatprep.subr.bf16.mxu0 0
        %394 = vmatpush2.bf16.msra.mxu0 0
        %395 = vmatprep.subr.bf16.mxu0 0
        %396 = vmatpush2.bf16.msra.mxu0 0
        %397 = vmatprep.subr.bf16.mxu0 0
        %398 = vmatpush2.bf16.msra.mxu0 0
        %399 = vmatprep.subr.bf16.mxu0 0
        %400 = vmatpush2.bf16.msra.mxu0 0
        %401 = vmatprep.subr.bf16.mxu0 0
        %402 = vmatpush2.bf16.msra.mxu0 0
        %403 = vmatprep.mubr.bf16.mxu0 0
        %404 = vmatmul.mubr.bf16.gmra.mxu0 %v366
        %v405 = vpop.f32.mrf.mxu0
        %v406 = vadd.f32 0.0, %v405
        %v407 = vpop.f32.mrf.mxu0
        %v408 = vpop.f32.mrf.mxu0
        %v409 = vpop.f32.mrf.mxu0
        %410 = vdwg.mxu0
        %v411 = vadd.f32 %v356, %v406
        %s412 = scalar_lea.vmem %s1, 16
        %v413 = vld [vmem:[%s412] sm:$0xf]
        %414 = vrot.lane.b32.xlu0 %v200, 111
        %v415 = vpop.permute.xlu0 %414
        %416 = vrot.lane.b32.xlu0 %v201, 111
        %v417 = vpop.permute.xlu0 %416
        %vm418 = vcmask 908288
        %v419 = vsel %vm418, %v415, %v417
        %v421 = vsel %vm208, %v413, 0
        %v424 = vsel %vm212, %v419, 0
        %426 = vmatprep.subr.bf16.mxu0 0
        %427 = vmatpush1.bf16.msra.mxu0 0
        %428 = vmatprep.subr.bf16.mxu0 0
        %429 = vmatpush1.bf16.msra.mxu0 0
        %430 = vmatprep.subr.bf16.mxu0 0
        %431 = vmatpush1.bf16.msra.mxu0 0
        %432 = vmatprep.subr.bf16.mxu0 0
        %433 = vmatpush1.bf16.msra.mxu0 0
        %434 = vmatprep.subr.bf16.mxu0 0
        %435 = vmatpush1.bf16.msra.mxu0 0
        %436 = vmatprep.subr.bf16.mxu0 0
        %437 = vmatpush1.bf16.msra.mxu0 0
        %438 = vmatprep.subr.bf16.mxu0 0
        %439 = vmatpush1.bf16.msra.mxu0 0
        %440 = vmatprep.subr.bf16.mxu0 0
        %441 = vmatpush1.bf16.msra.mxu0 %v424
        %442 = vmatprep.subr.bf16.mxu0 0
        %443 = vmatpush2.bf16.msra.mxu0 0
        %444 = vmatprep.subr.bf16.mxu0 0
        %445 = vmatpush2.bf16.msra.mxu0 0
        %446 = vmatprep.subr.bf16.mxu0 0
        %447 = vmatpush2.bf16.msra.mxu0 0
        %448 = vmatprep.subr.bf16.mxu0 0
        %449 = vmatpush2.bf16.msra.mxu0 0
        %450 = vmatprep.subr.bf16.mxu0 0
        %451 = vmatpush2.bf16.msra.mxu0 0
        %452 = vmatprep.subr.bf16.mxu0 0
        %453 = vmatpush2.bf16.msra.mxu0 0
        %454 = vmatprep.subr.bf16.mxu0 0
        %455 = vmatpush2.bf16.msra.mxu0 0
        %456 = vmatprep.subr.bf16.mxu0 0
        %457 = vmatpush2.bf16.msra.mxu0 0
        %458 = vmatprep.mubr.bf16.mxu0 0
        %459 = vmatmul.mubr.bf16.gmra.mxu0 %v421
        %v460 = vpop.f32.mrf.mxu0
        %v461 = vadd.f32 0.0, %v460
        %v462 = vpop.f32.mrf.mxu0
        %v463 = vpop.f32.mrf.mxu0
        %v464 = vpop.f32.mrf.mxu0
        %465 = vdwg.mxu0
        %v466 = vadd.f32 %v411, %v461
        %s467 = scalar_lea.vmem %s1, 20
        %v468 = vld [vmem:[%s467] sm:$0xf]
        %469 = vrot.lane.b32.xlu0 %v200, 110
        %v470 = vpop.permute.xlu0 %469
        %471 = vrot.lane.b32.xlu0 %v201, 110
        %v472 = vpop.permute.xlu0 %471
        %vm473 = vcmask 900096
        %v474 = vsel %vm473, %v470, %v472
        %v476 = vsel %vm208, %v468, 0
        %v479 = vsel %vm212, %v474, 0
        %481 = vmatprep.subr.bf16.mxu0 0
        %482 = vmatpush1.bf16.msra.mxu0 0
        %483 = vmatprep.subr.bf16.mxu0 0
        %484 = vmatpush1.bf16.msra.mxu0 0
        %485 = vmatprep.subr.bf16.mxu0 0
        %486 = vmatpush1.bf16.msra.mxu0 0
        %487 = vmatprep.subr.bf16.mxu0 0
        %488 = vmatpush1.bf16.msra.mxu0 0
        %489 = vmatprep.subr.bf16.mxu0 0
        %490 = vmatpush1.bf16.msra.mxu0 0
        %491 = vmatprep.subr.bf16.mxu0 0
        %492 = vmatpush1.bf16.msra.mxu0 0
        %493 = vmatprep.subr.bf16.mxu0 0
        %494 = vmatpush1.bf16.msra.mxu0 0
        %495 = vmatprep.subr.bf16.mxu0 0
        %496 = vmatpush1.bf16.msra.mxu0 %v479
        %497 = vmatprep.subr.bf16.mxu0 0
        %498 = vmatpush2.bf16.msra.mxu0 0
        %499 = vmatprep.subr.bf16.mxu0 0
        %500 = vmatpush2.bf16.msra.mxu0 0
        %501 = vmatprep.subr.bf16.mxu0 0
        %502 = vmatpush2.bf16.msra.mxu0 0
        %503 = vmatprep.subr.bf16.mxu0 0
        %504 = vmatpush2.bf16.msra.mxu0 0
        %505 = vmatprep.subr.bf16.mxu0 0
        %506 = vmatpush2.bf16.msra.mxu0 0
        %507 = vmatprep.subr.bf16.mxu0 0
        %508 = vmatpush2.bf16.msra.mxu0 0
        %509 = vmatprep.subr.bf16.mxu0 0
        %510 = vmatpush2.bf16.msra.mxu0 0
        %511 = vmatprep.subr.bf16.mxu0 0
        %512 = vmatpush2.bf16.msra.mxu0 0
        %513 = vmatprep.mubr.bf16.mxu0 0
        %514 = vmatmul.mubr.bf16.gmra.mxu0 %v476
        %v515 = vpop.f32.mrf.mxu0
        %v516 = vadd.f32 0.0, %v515
        %v517 = vpop.f32.mrf.mxu0
        %v518 = vpop.f32.mrf.mxu0
        %v519 = vpop.f32.mrf.mxu0
        %520 = vdwg.mxu0
        %v521 = vadd.f32 %v466, %v516
        %s522 = scalar_lea.vmem %s1, 24
        %v523 = vld [vmem:[%s522] sm:$0xf]
        %524 = vrot.lane.b32.xlu0 %v200, 96
        %v525 = vpop.permute.xlu0 %524
        %526 = vrot.lane.b32.xlu0 %v201, 96
        %v527 = vpop.permute.xlu0 %526
        %vm528 = vcmask 785408
        %v529 = vsel %vm528, %v525, %v527
        %v531 = vsel %vm208, %v523, 0
        %v534 = vsel %vm212, %v529, 0
        %536 = vmatprep.subr.bf16.mxu0 0
        %537 = vmatpush1.bf16.msra.mxu0 0
        %538 = vmatprep.subr.bf16.mxu0 0
        %539 = vmatpush1.bf16.msra.mxu0 0
        %540 = vmatprep.subr.bf16.mxu0 0
        %541 = vmatpush1.bf16.msra.mxu0 0
        %542 = vmatprep.subr.bf16.mxu0 0
        %543 = vmatpush1.bf16.msra.mxu0 0
        %544 = vmatprep.subr.bf16.mxu0 0
        %545 = vmatpush1.bf16.msra.mxu0 0
        %546 = vmatprep.subr.bf16.mxu0 0
        %547 = vmatpush1.bf16.msra.mxu0 0
        %548 = vmatprep.subr.bf16.mxu0 0
        %549 = vmatpush1.bf16.msra.mxu0 0
        %550 = vmatprep.subr.bf16.mxu0 0
        %551 = vmatpush1.bf16.msra.mxu0 %v534
        %552 = vmatprep.subr.bf16.mxu0 0
        %553 = vmatpush2.bf16.msra.mxu0 0
        %554 = vmatprep.subr.bf16.mxu0 0
        %555 = vmatpush2.bf16.msra.mxu0 0
        %556 = vmatprep.subr.bf16.mxu0 0
        %557 = vmatpush2.bf16.msra.mxu0 0
        %558 = vmatprep.subr.bf16.mxu0 0
        %559 = vmatpush2.bf16.msra.mxu0 0
        %560 = vmatprep.subr.bf16.mxu0 0
        %561 = vmatpush2.bf16.msra.mxu0 0
        %562 = vmatprep.subr.bf16.mxu0 0
        %563 = vmatpush2.bf16.msra.mxu0 0
        %564 = vmatprep.subr.bf16.mxu0 0
        %565 = vmatpush2.bf16.msra.mxu0 0
        %566 = vmatprep.subr.bf16.mxu0 0
        %567 = vmatpush2.bf16.msra.mxu0 0
        %568 = vmatprep.mubr.bf16.mxu0 0
        %569 = vmatmul.mubr.bf16.gmra.mxu0 %v531
        %v570 = vpop.f32.mrf.mxu0
        %v571 = vadd.f32 0.0, %v570
        %v572 = vpop.f32.mrf.mxu0
        %v573 = vpop.f32.mrf.mxu0
        %v574 = vpop.f32.mrf.mxu0
        %575 = vdwg.mxu0
        %v576 = vadd.f32 %v521, %v571
        %s577 = scalar_lea.vmem %s1, 28
        %v578 = vld [vmem:[%s577] sm:$0xf]
        %579 = vrot.lane.b32.xlu0 %v200, 95
        %v580 = vpop.permute.xlu0 %579
        %581 = vrot.lane.b32.xlu0 %v201, 95
        %v582 = vpop.permute.xlu0 %581
        %vm583 = vcmask 777216
        %v584 = vsel %vm583, %v580, %v582
        %v586 = vsel %vm208, %v578, 0
        %v589 = vsel %vm212, %v584, 0
        %591 = vmatprep.subr.bf16.mxu0 0
        %592 = vmatpush1.bf16.msra.mxu0 0
        %593 = vmatprep.subr.bf16.mxu0 0
        %594 = vmatpush1.bf16.msra.mxu0 0
        %595 = vmatprep.subr.bf16.mxu0 0
        %596 = vmatpush1.bf16.msra.mxu0 0
        %597 = vmatprep.subr.bf16.mxu0 0
        %598 = vmatpush1.bf16.msra.mxu0 0
        %599 = vmatprep.subr.bf16.mxu0 0
        %600 = vmatpush1.bf16.msra.mxu0 0
        %601 = vmatprep.subr.bf16.mxu0 0
        %602 = vmatpush1.bf16.msra.mxu0 0
        %603 = vmatprep.subr.bf16.mxu0 0
        %604 = vmatpush1.bf16.msra.mxu0 0
        %605 = vmatprep.subr.bf16.mxu0 0
        %606 = vmatpush1.bf16.msra.mxu0 %v589
        %607 = vmatprep.subr.bf16.mxu0 0
        %608 = vmatpush2.bf16.msra.mxu0 0
        %609 = vmatprep.subr.bf16.mxu0 0
        %610 = vmatpush2.bf16.msra.mxu0 0
        %611 = vmatprep.subr.bf16.mxu0 0
        %612 = vmatpush2.bf16.msra.mxu0 0
        %613 = vmatprep.subr.bf16.mxu0 0
        %614 = vmatpush2.bf16.msra.mxu0 0
        %615 = vmatprep.subr.bf16.mxu0 0
        %616 = vmatpush2.bf16.msra.mxu0 0
        %617 = vmatprep.subr.bf16.mxu0 0
        %618 = vmatpush2.bf16.msra.mxu0 0
        %619 = vmatprep.subr.bf16.mxu0 0
        %620 = vmatpush2.bf16.msra.mxu0 0
        %621 = vmatprep.subr.bf16.mxu0 0
        %622 = vmatpush2.bf16.msra.mxu0 0
        %623 = vmatprep.mubr.bf16.mxu0 0
        %624 = vmatmul.mubr.bf16.gmra.mxu0 %v586
        %v625 = vpop.f32.mrf.mxu0
        %v626 = vadd.f32 0.0, %v625
        %v627 = vpop.f32.mrf.mxu0
        %v628 = vpop.f32.mrf.mxu0
        %v629 = vpop.f32.mrf.mxu0
        %630 = vdwg.mxu0
        %v631 = vadd.f32 %v576, %v626
        %s632 = scalar_lea.vmem %s1, 32
        %v633 = vld [vmem:[%s632] sm:$0xf]
        %634 = vrot.lane.b32.xlu0 %v200, 94
        %v635 = vpop.permute.xlu0 %634
        %636 = vrot.lane.b32.xlu0 %v201, 94
        %v637 = vpop.permute.xlu0 %636
        %vm638 = vcmask 769024
        %v639 = vsel %vm638, %v635, %v637
        %v641 = vsel %vm208, %v633, 0
        %v644 = vsel %vm212, %v639, 0
        %646 = vmatprep.subr.bf16.mxu0 0
        %647 = vmatpush1.bf16.msra.mxu0 0
        %648 = vmatprep.subr.bf16.mxu0 0
        %649 = vmatpush1.bf16.msra.mxu0 0
        %650 = vmatprep.subr.bf16.mxu0 0
        %651 = vmatpush1.bf16.msra.mxu0 0
        %652 = vmatprep.subr.bf16.mxu0 0
        %653 = vmatpush1.bf16.msra.mxu0 0
        %654 = vmatprep.subr.bf16.mxu0 0
        %655 = vmatpush1.bf16.msra.mxu0 0
        %656 = vmatprep.subr.bf16.mxu0 0
        %657 = vmatpush1.bf16.msra.mxu0 0
        %658 = vmatprep.subr.bf16.mxu0 0
        %659 = vmatpush1.bf16.msra.mxu0 0
        %660 = vmatprep.subr.bf16.mxu0 0
        %661 = vmatpush1.bf16.msra.mxu0 %v644
        %662 = vmatprep.subr.bf16.mxu0 0
        %663 = vmatpush2.bf16.msra.mxu0 0
        %664 = vmatprep.subr.bf16.mxu0 0
        %665 = vmatpush2.bf16.msra.mxu0 0
        %666 = vmatprep.subr.bf16.mxu0 0
        %667 = vmatpush2.bf16.msra.mxu0 0
        %668 = vmatprep.subr.bf16.mxu0 0
        %669 = vmatpush2.bf16.msra.mxu0 0
        %670 = vmatprep.subr.bf16.mxu0 0
        %671 = vmatpush2.bf16.msra.mxu0 0
        %672 = vmatprep.subr.bf16.mxu0 0
        %673 = vmatpush2.bf16.msra.mxu0 0
        %674 = vmatprep.subr.bf16.mxu0 0
        %675 = vmatpush2.bf16.msra.mxu0 0
        %676 = vmatprep.subr.bf16.mxu0 0
        %677 = vmatpush2.bf16.msra.mxu0 0
        %678 = vmatprep.mubr.bf16.mxu0 0
        %679 = vmatmul.mubr.bf16.gmra.mxu0 %v641
        %v680 = vpop.f32.mrf.mxu0
        %v681 = vadd.f32 0.0, %v680
        %v682 = vpop.f32.mrf.mxu0
        %v683 = vpop.f32.mrf.mxu0
        %v684 = vpop.f32.mrf.mxu0
        %685 = vdwg.mxu0
        %v686 = vadd.f32 %v631, %v681
        %v687 = vld [vmem:[%s2] sm:$0xff]
        %689 = vset.pattern.permute.xlu0 0
        %690 = vperm.xlu0 %689, %v687
        %v691 = vpop.permute.xlu0 %690
        %v693 = vadd.f32 %v686, %v691
        %v694 = vmax.f32 %v693, 0.0
        %v695 = vpack.c.bf16 %v694, %v694
        %696 = vst [vmem:[%s177] sm:$0xf] %v695
        %s697 = sand.u32 %s107, 1
        %s698 = scalar_lea.sflag [#allocation3], %s697
        %s699 = sand.u32 %s107, 1
        %s700 = smul.addr %s699, 4
        %s701 = scalar_lea.vmem [#allocation2], %s700
        // Predicated region
        $region33: #{tpu_custom_call.1} parent=31 // pred_check
          %p702 = pneg %p117
        $region34: #{tpu_custom_call.1} parent=31 // pred_check_branch
          %704 = sbr.rel (%p702) target = $region36
        $region35: #{tpu_custom_call.1} parent=31 // pred_region
          %s706 = ssub.s32 64, 64
          %707 = vsyncadd %s698, %s706
          %s708 = smul.addr %s21, 2
          %s709 = sadd.s32 %s22, %s708
          %s710 = smul.addr %s709, 64
          %s711 = scalar_lea.hbm %s3, %s710
          %s713 = sshll.u32 %s701, 4
          %s714 = int_to_ptr.vmem [resolvable:$true] %s713
          %716 = dma.vmem_to_hbm [thread:$0]  %s714, 64, %s711, %s698
        $region36: #{tpu_custom_call.1} parent=31 // pred_fallthru
          _
      $region32: #{tpu_custom_call.1} parent=5 // pred_fallthru
        _
      %p717 = scmp.le.s32.totalorder 2, %s12
      // Predicated region
      $region37: #{tpu_custom_call.1} parent=5 // pred_check
        %p718 = pneg %p717
      $region38: #{tpu_custom_call.1} parent=5 // pred_check_branch
        %720 = sbr.rel (%p718) target = $region40
      $region39: #{tpu_custom_call.1} parent=5 // pred_region
        %s721 = ssub.s32 %s12, 2
        // Predicated region
        $region41: #{tpu_custom_call.1} parent=39 // pred_check
          %p722 = pneg %p123
        $region42: #{tpu_custom_call.1} parent=39 // pred_check_branch
          %724 = sbr.rel (%p722) target = $region44
        $region43: #{tpu_custom_call.1} parent=39 // pred_region
          %s725 = sand.u32 %s108, 1
          %s726 = scalar_lea.sflag [#allocation3], %s725
          %s727 = sand.u32 %s108, 1
          %s728 = smul.addr %s727, 4
          %s729 = scalar_lea.vmem [#allocation2], %s728
          %730 = dma.done %s726, 64
        $region44: #{tpu_custom_call.1} parent=39 // pred_fallthru
          _
      $region40: #{tpu_custom_call.1} parent=5 // pred_fallthru
        _
    $region6: #{tpu_custom_call.1} parent=1 // loop_footer
      %s16 = sadd.s32 1, %s12
    $region7: #{tpu_custom_call.1} parent=1 // loop_footer_branch
      %11 = sbr.rel target = $region3
    $region8: #{tpu_custom_call.1} parent=1 // loop_exit
      _
    %731 = vsyncpa [#allocation3], 1
    %s732 = scalar_lea.sflag [#allocation3], 1
    %733 = vsyncpa %s732, 1

</llo_original>
